<compile_context>
chip_gen: v6e
topology: v6e:2x2x1
jax: 0.10.0
libtpu: 0.0.40
codegen_flags: <defaults>
</compile_context>

<pallas_src>
import math

import jax
import jax.numpy as jnp
from jax.experimental import pallas as pl
from jax.experimental.pallas import tpu as pltpu

LANE = 128


# --------------------------- Pallas kernel ------------------------------
def _pe_add_kernel(x_ref, pe_ref, o_ref):
    # x_ref : (bb, bs)  batch block x lane block of the flattened (S*D) axis
    # pe_ref: (1,  bs)  shared positional-encoding row (broadcast over sublanes)
    o_ref[...] = x_ref[...] + pe_ref[...]


# --------------------------- helpers ------------------------------------
def _sublane_pack(dtype):
    return {4: 8, 2: 16, 1: 32}.get(jnp.dtype(dtype).itemsize, 8)


def _round_up(n, m):
    return ((n + m - 1) // m) * m


# --------------------------- wrapper ------------------------------------
def positional_encoding_forward(x, pe, *, vmem_budget_bytes=24 * 1024 * 1024,
                                lane_block_target=8192):
    """x: (B, S, D) float; pe: (max_len, D) buffer.  Returns x + pe[None, :S, :]."""
    B, S, D = x.shape
    assert S <= pe.shape[0], "sequence length exceeds max_len of the pe buffer"

    dtype = x.dtype
    itemsize = jnp.dtype(dtype).itemsize
    pack = _sublane_pack(dtype)
    sd = S * D

    # Lane-dense flattened view: (B, S*D).  No padding / slicing round-trips.
    xf = x.reshape(B, sd)
    pe_slab = pe[:S].reshape(1, sd).astype(dtype)

    # ---- lane block (bs) along the flattened S*D axis -----------------------
    if sd % LANE == 0 and sd > lane_block_target:
        bs = lane_block_target
        # Prefer a divisor of sd so every store stays an unmasked lane-dense vst.
        while bs >= LANE and sd % bs != 0:
            bs -= LANE
        if bs < LANE:
            bs = lane_block_target  # ragged last lane block; OOB writes discarded
    else:
        bs = sd  # full axis (block == full array dim is always legal)

    # ---- batch block (bb) from the VMEM budget ------------------------------
    # Double-buffered input + output ~ 4 * bb * bs * itemsize (+ tiny pe row).
    max_bb = max(pack, (vmem_budget_bytes // (4 * bs * itemsize)) // pack * pack)
    bb = min(max_bb, _round_up(B, pack))

    grid = (pl.cdiv(B, bb), pl.cdiv(sd, bs))

    tile_bytes = bb * bs * itemsize
    required = 4 * tile_bytes + 2 * bs * itemsize + (1 << 20)
    vmem_limit = int(min(max(required, 32 * 1024 * 1024), 48 * 1024 * 1024))

    out = pl.pallas_call(
        _pe_add_kernel,
        out_shape=jax.ShapeDtypeStruct((B, sd), dtype),
        grid=grid,
        in_specs=[
            pl.BlockSpec((bb, bs), lambda i, j: (i, j)),   # batch/lane block of x
            pl.BlockSpec((1, bs), lambda i, j: (0, j)),    # shared pe row
        ],
        out_specs=pl.BlockSpec((bb, bs), lambda i, j: (i, j)),
        compiler_params=pltpu.CompilerParams(
            dimension_semantics=("parallel", "parallel"),
            vmem_limit_bytes=vmem_limit,
        ),
    )(xf, pe_slab)

    return out.reshape(B, S, D)


# ---------------- deterministic pe buffer (matches the PyTorch __init__) -----
def make_pe(max_len, d_model, dtype=jnp.float32):
    position = jnp.arange(max_len, dtype=jnp.float32)[:, None]                   # (max_len, 1)
    div_term = jnp.exp(jnp.arange(0, d_model, 2, dtype=jnp.float32)
                       * (-math.log(10000.0) / d_model))                         # (ceil(d/2),)
    ang = position * div_term                                                    # (max_len, ceil(d/2))
    pe = jnp.zeros((max_len, d_model), jnp.float32)
    pe = pe.at[:, 0::2].set(jnp.sin(ang))
    pe = pe.at[:, 1::2].set(jnp.cos(ang[:, : d_model // 2]))                     # odd-d_model safe
    return pe.astype(dtype)


# ---------------- pure-JAX reference (same math, no Pallas) ------------------
def ref_forward(x, pe):
    return x + pe[None, : x.shape[1], :].astype(x.dtype)


if __name__ == "__main__":
    key = jax.random.PRNGKey(0)
    k1, k2, k3 = jax.random.split(key, 3)

    # --- small case (module's natural shapes): B=2, S=8, D=32 ----------------
    D_MODEL, MAX_LEN, SEQ = 32, 200, 8
    pe = make_pe(MAX_LEN, D_MODEL)
    x_small = jax.random.normal(k1, (2, SEQ, D_MODEL), jnp.float32)
    out_small = jax.block_until_ready(positional_encoding_forward(x_small, pe))
    assert out_small.shape == x_small.shape
    assert bool(jnp.all(jnp.isfinite(out_small)))
    assert bool(jnp.allclose(out_small, ref_forward(x_small, pe), atol=1e-6, rtol=1e-6))

    # --- larger batch: exercises sublane-rounded ragged batch block ----------
    x_big = jax.random.normal(k2, (20, SEQ, D_MODEL), jnp.float32)
    out_big = jax.block_until_ready(positional_encoding_forward(x_big, pe))
    assert bool(jnp.allclose(out_big, ref_forward(x_big, pe), atol=1e-6, rtol=1e-6))

    # --- longer sequence: exercises the second (lane) grid axis --------------
    D2, S2 = 128, 128                       # S*D = 16384 > 8192 -> 2 lane blocks
    pe2 = make_pe(MAX_LEN, D2)
    x_long = jax.random.normal(k3, (4, S2, D2), jnp.float32)
    out_long = jax.block_until_ready(positional_encoding_forward(x_long, pe2))
    assert bool(jnp.allclose(out_long, ref_forward(x_long, pe2), atol=1e-6, rtol=1e-6))

    print("KERNEL_OK")
</pallas_src>

<mosaic_0001>
module attributes {stable_mosaic.version = 11 : i64} {
  func.func @_pe_add_kernel(%arg0: i32, %arg1: i32, %arg2: memref<8x256xf32, #tpu.memory_space<vmem>>, %arg3: memref<1x256xf32, #tpu.memory_space<vmem>>, %arg4: memref<8x256xf32, #tpu.memory_space<vmem>>) attributes {dimension_semantics = [#tpu.dimension_semantics<parallel>, #tpu.dimension_semantics<parallel>], iteration_bounds = array<i64: 1, 1>, scalar_prefetch = 0 : i64, scratch_operands = 0 : i64, tpu.core_type = #tpu.core_type<tc>, window_params = [{transform_indices = @transform_0, window_bounds = array<i64: 8, 256>}, {transform_indices = @transform_1, window_bounds = array<i64: 1, 256>}, {transform_indices = @transform_2, window_bounds = array<i64: 8, 256>}]} {
    %c0 = arith.constant 0 : index
    %c0_0 = arith.constant 0 : index
    %0 = vector.load %arg2[%c0, %c0_0] : memref<8x256xf32, #tpu.memory_space<vmem>>, vector<8x256xf32>
    %c0_1 = arith.constant 0 : index
    %c0_2 = arith.constant 0 : index
    %1 = vector.load %arg3[%c0_1, %c0_2] : memref<1x256xf32, #tpu.memory_space<vmem>>, vector<1x256xf32>
    %2 = vector.broadcast %1 : vector<1x256xf32> to vector<8x256xf32>
    %3 = arith.addf %0, %2 : vector<8x256xf32>
    %c0_3 = arith.constant 0 : index
    %c0_4 = arith.constant 0 : index
    %4 = vector.load %arg4[%c0_3, %c0_4] : memref<8x256xf32, #tpu.memory_space<vmem>>, vector<8x256xf32>
    tpu.vector_store %arg4[%c0_3, %c0_4], %3 {strides = array<i32>} : memref<8x256xf32, #tpu.memory_space<vmem>>, vector<8x256xf32>,
    return
  }
  func.func @transform_0(%arg0: i32, %arg1: i32) -> (i32, i32) {
    %c0_i32 = arith.constant 0 : i32
    return %arg0, %arg1 : i32, i32
  }
  func.func @transform_1(%arg0: i32, %arg1: i32) -> (i32, i32) {
    %c0_i32 = arith.constant 0 : i32
    %c0_i32_0 = arith.constant 0 : i32
    return %c0_i32, %arg1 : i32, i32
  }
  func.func @transform_2(%arg0: i32, %arg1: i32) -> (i32, i32) {
    %c0_i32 = arith.constant 0 : i32
    return %arg0, %arg1 : i32, i32
  }
}

</mosaic_0001>

<llo_original>
// kernel: tpu_custom_call.1
$region0: #{tpu_custom_call.1}
  #allocation0 [shape = 'u32[]', space=smem, size = 0x4, offset = 0x4, fixed_abs, tag = 'smem constant byte address 0x4 - core index']
  #allocation1 [shape = 'u32[144,128]{1,0:T(1,128)}', space=vmem, size = 0x12000, scoped, tag = 'internal scratch']
  %s0 = inlined_call_operand.hbm [shape: f32[2,256], index: 0, kind: input, shape index: {}]
  %s1 = inlined_call_operand.hbm [shape: f32[1,256], index: 1, kind: input, shape index: {}]
  %s2 = inlined_call_operand.hbm [shape: f32[2,256], index: 2, kind: output, shape index: {}]
  %s3 = sld [smem:[#allocation0]]
  $region26: #{tpu_custom_call.1} parent=0
    _
  %s5 = ssub.s32 1, %s3
  %s6 = scalar_select 0, %s5, %s3
  $region1: #{tpu_custom_call.1} parent=0
    #allocation2 [shape = 'u8[8192]{0}', space=vmem, size = 0x2000, scoped, tag = 'input window, operand 0, single buffered']
    #allocation3 [shape = 's32[1]{0}', space=sflag, size = 0x4, scoped, tag = 'scoped memory for tpu_custom_call.1']
    #allocation4 [shape = 's32[1]{0}', space=sflag, size = 0x4, scoped, tag = 'scoped memory for tpu_custom_call.1']
    #allocation5 [shape = 'u8[1024]{0}', space=vmem, size = 0x400, scoped, tag = 'input window, operand 1, single buffered']
    #allocation6 [shape = 's32[1]{0}', space=sflag, size = 0x4, scoped, tag = 'scoped memory for tpu_custom_call.1']
    #allocation7 [shape = 'u8[8192]{0}', space=vmem, size = 0x2000, scoped, tag = 'output window, operand 0, single buffered']
    %7 = vsyncpa [#allocation3], 0
    %8 = vsyncpa [#allocation6], 0
    %9 = vsyncpa [#allocation4], 0
    // Predicated region
    $region2: #{tpu_custom_call.1} parent=1 // pred_check
      _
    $region3: #{tpu_custom_call.1} parent=1 // pred_check_branch
      %11 = sbr.rel (0) target = $region5
    $region4: #{tpu_custom_call.1} parent=1 // pred_region
      %s13 = ssub.s32 256, 64
      %14 = vsyncadd [#allocation3], %s13
      %s15 = sshll.u32 [#allocation2], 4
      %s16 = int_to_ptr.vmem [resolvable:$true] %s15
      %21 = dma.hbm_to_vmem [thread:$0]  %s0, 64, %s16, [#allocation3], 64, 64, 4
    $region5: #{tpu_custom_call.1} parent=1 // pred_fallthru
      _
    // Predicated region
    $region6: #{tpu_custom_call.1} parent=1 // pred_check
      _
    $region7: #{tpu_custom_call.1} parent=1 // pred_check_branch
      %23 = sbr.rel (0) target = $region9
    $region8: #{tpu_custom_call.1} parent=1 // pred_region
      %s25 = ssub.s32 32, 32
      %26 = vsyncadd [#allocation6], %s25
      %s28 = sshll.u32 [#allocation5], 4
      %s29 = int_to_ptr.vmem [resolvable:$true] %s28
      %31 = dma.hbm_to_vmem [thread:$0]  %s1, 32, %s29, [#allocation6]
    $region9: #{tpu_custom_call.1} parent=1 // pred_fallthru
      _
    // Predicated region
    $region10: #{tpu_custom_call.1} parent=1 // pred_check
      _
    $region11: #{tpu_custom_call.1} parent=1 // pred_check_branch
      %33 = sbr.rel (0) target = $region13
    $region12: #{tpu_custom_call.1} parent=1 // pred_region
      %34 = dma.done [#allocation3], 256
    $region13: #{tpu_custom_call.1} parent=1 // pred_fallthru
      _
    // Predicated region
    $region14: #{tpu_custom_call.1} parent=1 // pred_check
      _
    $region15: #{tpu_custom_call.1} parent=1 // pred_check_branch
      %36 = sbr.rel (0) target = $region17
    $region16: #{tpu_custom_call.1} parent=1 // pred_region
      %37 = dma.done [#allocation6], 32
    $region17: #{tpu_custom_call.1} parent=1 // pred_fallthru
      _
    %v38 = vld [vmem:[#allocation2] sm:$0xf]
    %v39 = vld [vmem:[#allocation2 + $0x4] sm:$0xf]
    %v40 = vld [vmem:[#allocation2 + $0x8] sm:$0xf]
    %v41 = vld [vmem:[#allocation2 + $0xc] sm:$0xf]
    %v42 = vld [vmem:[#allocation5] sm:$0x3]
    %v44 = vlaneseq
    %v45 = vshrl.u32 %v44, 7
    %v46 = vsub.s32 0, %v45
    %v47 = vrot.slane %v42, %v46
    %v48 = vlaneseq
    %v49 = vshrl.u32 %v48, 7
    %v50 = vsub.s32 1, %v49
    %v51 = vrot.slane %v42, %v50
    %v52 = vcombine.low %v47, %v51
    %v53 = vcombine.high %v47, %v51
    %v55 = vunpack.c.l.s4 1983009808
    %v56 = vunpack.c.0.s8 %v55
    %v57 = vlaneseq
    %v58 = vshrl.u32 %v57, 7
    %v59 = vsub.s32 %v56, %v58
    %v60 = vrot.slane %v52, %v59
    %v62 = vunpack.c.l.s4 1983009808
    %v63 = vunpack.c.0.s8 %v62
    %v64 = vlaneseq
    %v65 = vshrl.u32 %v64, 7
    %v66 = vsub.s32 %v63, %v65
    %v67 = vrot.slane %v53, %v66
    %v68 = vcombine.high %v60, %v60
    %v69 = vcombine.high %v67, %v67
    %v74 = vadd.f32 %v38, %v60
    %v75 = vadd.f32 %v39, %v68
    %v76 = vadd.f32 %v40, %v67
    %v77 = vadd.f32 %v41, %v69
    %78 = vst [vmem:[#allocation7] sm:$0xf] %v74
    %79 = vst [vmem:[#allocation7 + $0x4] sm:$0xf] %v75
    %80 = vst [vmem:[#allocation7 + $0x8] sm:$0xf] %v76
    %81 = vst [vmem:[#allocation7 + $0xc] sm:$0xf] %v77
    // Predicated region
    $region18: #{tpu_custom_call.1} parent=1 // pred_check
      _
    $region19: #{tpu_custom_call.1} parent=1 // pred_check_branch
      %83 = sbr.rel (0) target = $region21
    $region20: #{tpu_custom_call.1} parent=1 // pred_region
      %s85 = ssub.s32 256, 64
      %86 = vsyncadd [#allocation4], %s85
      %s87 = sshll.u32 [#allocation7], 4
      %s88 = int_to_ptr.vmem [resolvable:$true] %s87
      %93 = dma.vmem_to_hbm [thread:$0]  %s88, 64, %s2, [#allocation4], 64, 64, 4
    $region21: #{tpu_custom_call.1} parent=1 // pred_fallthru
      _
    // Predicated region
    $region22: #{tpu_custom_call.1} parent=1 // pred_check
      _
    $region23: #{tpu_custom_call.1} parent=1 // pred_check_branch
      %95 = sbr.rel (0) target = $region25
    $region24: #{tpu_custom_call.1} parent=1 // pred_region
      %96 = dma.done [#allocation4], 256
    $region25: #{tpu_custom_call.1} parent=1 // pred_fallthru
      _
    %97 = vsyncpa [#allocation3], 1
    %98 = vsyncpa [#allocation6], 1
    %99 = vsyncpa [#allocation4], 1

</llo_original>
